<compile_context>
chip_gen: v7x
topology: tpu7x:2x2x1
jax: 0.10.0
libtpu: 0.0.40
codegen_flags: <defaults>
</compile_context>

<pallas_src>
import jax
import jax.numpy as jnp
from jax.experimental import pallas as pl
from jax.experimental.pallas import tpu as pltpu

NEG_SLOPE = 0.2  # LeakyReLU(0.2)


def _leaky(v):
    return jnp.where(v >= 0, v, NEG_SLOPE * v)


def otnvae_kernel(x_ref, noise_ref, wenc_ref, benc_ref, wml_ref, bml_ref,
                  w1_ref, b1_ref, w2_ref, b2_ref,
                  out_ref, mean_ref, std_ref):
    d = x_ref.shape[1]
    x = x_ref[...]                                                         # (TN, D)

    # ---------------- encoder ----------------
    z = _leaky(jnp.dot(x, wenc_ref[...],
                       preferred_element_type=jnp.float32) + benc_ref[...])       # (TN, H)
    # fused mean | log_std head: one matmul, split lanes in-kernel
    ml = jnp.dot(z, wml_ref[...],
                 preferred_element_type=jnp.float32) + bml_ref[...]               # (TN, 2D)
    mean = ml[:, :d]
    std = jnp.exp(ml[:, d:])
    # reparameterization: noise ~ N(0,1) generated in the wrapper (torch.randn_like)
    encoded = jnp.tanh(mean + std * noise_ref[...])                        # (TN, D)
    mean_ref[...] = mean
    std_ref[...] = std

    # ---------------- decoders (all D of them, batched) ----------------
    # linear1 of every decoder at once: (TN, D) @ (D, D*H)
    h = _leaky(jnp.dot(encoded, w1_ref[...],
                       preferred_element_type=jnp.float32) + b1_ref[...])         # (TN, D*H)
    # linear2 of every decoder + prefix-sum over decoders folded into one K=D*H matmul
    out_ref[...] = jnp.tanh(jnp.dot(h, w2_ref[...],
                                    preferred_element_type=jnp.float32)
                            + b2_ref[...])                                 # (TN, D*D)


def _round_up(n, m):
    return ((n + m - 1) // m) * m


def pack_params(params):
    """Host-side re-layout: fuse the mean/log_std heads, pack the D decoders into two
    lane-dense matrices (block-row expansion of linear1, lower-block-triangular linear2)."""
    D, H = params["dec_w1"].shape
    w_ml = jnp.concatenate([params["w_mean"], params["w_log_std"]], axis=1)      # (H, 2D)
    b_ml = jnp.concatenate([params["b_mean"], params["b_log_std"]], axis=1)      # (1, 2D)
    eye = jnp.eye(D, dtype=jnp.float32)
    w1exp = (eye[:, :, None] * params["dec_w1"][None, :, :]).reshape(D, D * H)   # (D, D*H)
    b1flat = params["dec_b1"].reshape(1, D * H)
    tri = (jnp.arange(D)[:, None] <= jnp.arange(D)[None, :]).astype(jnp.float32)  # j <= i
    w2pack = (params["dec_w2"][:, :, None, :] *
              tri[:, None, :, None]).reshape(D * H, D * D)                       # (D*H, D*D)
    b2cum = jnp.cumsum(params["dec_b2"], axis=0).reshape(1, D * D)               # (1, D*D)
    return dict(w_enc=params["w_enc"], b_enc=params["b_enc"],
                w_ml=w_ml, b_ml=b_ml,
                w1exp=w1exp, b1flat=b1flat, w2pack=w2pack, b2cum=b2cum)


def otnvae_forward(x, packed, noise, *, tn=512):
    N, D = x.shape

    # batch tile: multiple of 8 sublanes, bounded by (rounded-up) batch size.
    # Footprint per step is a few KB/row, so tn<=4096 is comfortable even on v7x's 64 MiB VMEM.
    tn = max(8, min(_round_up(tn, 8), _round_up(N, 8)))
    Np = _round_up(N, tn)
    if Np != N:
        pad = [(0, Np - N), (0, 0)]
        x = jnp.pad(x, pad)
        noise = jnp.pad(noise, pad)

    grid = (Np // tn,)
    row_spec = lambda width: pl.BlockSpec((tn, width), lambda i: (i, 0))
    full_spec = lambda a: pl.BlockSpec(a.shape, lambda i: (0, 0))

    args = (x, noise,
            packed["w_enc"], packed["b_enc"], packed["w_ml"], packed["b_ml"],
            packed["w1exp"], packed["b1flat"], packed["w2pack"], packed["b2cum"])

    out_flat, mean, std = pl.pallas_call(
        otnvae_kernel,
        out_shape=(jax.ShapeDtypeStruct((Np, D * D), jnp.float32),
                   jax.ShapeDtypeStruct((Np, D), jnp.float32),
                   jax.ShapeDtypeStruct((Np, D), jnp.float32)),
        grid_spec=pltpu.PrefetchScalarGridSpec(
            num_scalar_prefetch=0,
            grid=grid,
            in_specs=[row_spec(D), row_spec(D)] + [full_spec(a) for a in args[2:]],
            out_specs=(row_spec(D * D), row_spec(D), row_spec(D)),
        ),
        compiler_params=pltpu.CompilerParams(
            dimension_semantics=("parallel",),           # megacore split on v7x
            vmem_limit_bytes=32 * 1024 * 1024,
        ),
    )(*args)

    # back to the PyTorch layout: (D, N, D)
    outputs = out_flat[:N].reshape(N, D, D).transpose(1, 0, 2)
    return outputs, mean[:N], std[:N]


def init_params(key, native_dim, hidden):
    """Deterministic synthetic init matching PyTorch Linear default bounds."""
    ks = jax.random.split(key, 7)

    def lin(k, fan_in, fan_out):
        kw, kb = jax.random.split(k)
        bound = 1.0 / float(fan_in) ** 0.5
        w = jax.random.uniform(kw, (fan_in, fan_out), jnp.float32, -bound, bound)
        b = jax.random.uniform(kb, (1, fan_out), jnp.float32, -bound, bound)
        return w, b

    w_enc, b_enc = lin(ks[0], native_dim, hidden)
    w_mean, b_mean = lin(ks[1], hidden, native_dim)
    w_ls, b_ls = lin(ks[2], hidden, native_dim)

    # decoders: linear1 = Linear(1, hidden)  (bound = 1/sqrt(1) = 1)
    dec_w1 = jax.random.uniform(ks[3], (native_dim, hidden), jnp.float32, -1.0, 1.0)
    dec_b1 = jax.random.uniform(ks[4], (native_dim, hidden), jnp.float32, -1.0, 1.0)
    # decoders: linear2 = Linear(hidden, native_dim)
    b2 = 1.0 / float(hidden) ** 0.5
    dec_w2 = jax.random.uniform(ks[5], (native_dim, hidden, native_dim), jnp.float32, -b2, b2)
    dec_b2 = jax.random.uniform(ks[6], (native_dim, native_dim), jnp.float32, -b2, b2)

    return dict(w_enc=w_enc, b_enc=b_enc,
                w_mean=w_mean, b_mean=b_mean,
                w_log_std=w_ls, b_log_std=b_ls,
                dec_w1=dec_w1, dec_b1=dec_b1, dec_w2=dec_w2, dec_b2=dec_b2)


def otnvae_reference(x, params, noise):
    """Pure-JAX reference with the original per-decoder running-sum loop."""
    hp = jax.lax.Precision.HIGHEST
    z = _leaky(jnp.dot(x, params["w_enc"], precision=hp) + params["b_enc"])
    mean = jnp.dot(z, params["w_mean"], precision=hp) + params["b_mean"]
    log_std = jnp.dot(z, params["w_log_std"], precision=hp) + params["b_log_std"]
    std = jnp.exp(log_std)
    encoded = jnp.tanh(mean + std * noise)
    N, D = x.shape
    run = jnp.zeros((N, D), jnp.float32)
    outs = []
    for j in range(D):
        h = _leaky(encoded[:, j:j + 1] * params["dec_w1"][j:j + 1, :]
                   + params["dec_b1"][j:j + 1, :])
        run = run + (jnp.dot(h, params["dec_w2"][j], precision=hp)
                     + params["dec_b2"][j:j + 1, :])
        outs.append(jnp.tanh(run))
    return jnp.stack(outs, axis=0), mean, std


if __name__ == "__main__":
    # TODO(synk): original PyTorch OTNVAE.forward unpacks `encoded, mean, std` from an encoder
    # that returns a single tensor (a latent bug); we implement the clearly intended semantics:
    # encoder returns (tanh(mean + std*noise), mean, std). torch.randn_like is hoisted to the
    # wrapper as an explicit `noise` input for determinism.
    key = jax.random.PRNGKey(0)
    kx, kn, kp = jax.random.split(key, 3)

    N, D, H = 8, 8, 32          # batch, native_dim, hidden_layer
    x = jax.random.normal(kx, (N, D), jnp.float32)
    noise = jax.random.normal(kn, (N, D), jnp.float32)   # torch.randn_like(std)
    params = init_params(kp, D, H)
    packed = pack_params(params)

    outputs, mean, std = otnvae_forward(x, packed, noise)
    jax.block_until_ready((outputs, mean, std))

    assert outputs.shape == (D, N, D)
    assert mean.shape == (N, D) and std.shape == (N, D)

    ref_out, ref_mean, ref_std = otnvae_reference(x, params, noise)
    assert jnp.allclose(outputs, ref_out, atol=2e-3, rtol=2e-3)
    assert jnp.allclose(mean, ref_mean, atol=2e-3, rtol=2e-3)
    assert jnp.allclose(std, ref_std, atol=2e-3, rtol=2e-3)

    print("KERNEL_OK")
</pallas_src>

<mosaic_0001>
module attributes {stable_mosaic.version = 11 : i64} {
  func.func @otnvae_kernel(%arg0: i32, %arg1: memref<8x8xf32, #tpu.memory_space<vmem>>, %arg2: memref<8x8xf32, #tpu.memory_space<vmem>>, %arg3: memref<8x32xf32, #tpu.memory_space<vmem>>, %arg4: memref<1x32xf32, #tpu.memory_space<vmem>>, %arg5: memref<32x16xf32, #tpu.memory_space<vmem>>, %arg6: memref<1x16xf32, #tpu.memory_space<vmem>>, %arg7: memref<8x256xf32, #tpu.memory_space<vmem>>, %arg8: memref<1x256xf32, #tpu.memory_space<vmem>>, %arg9: memref<256x64xf32, #tpu.memory_space<vmem>>, %arg10: memref<1x64xf32, #tpu.memory_space<vmem>>, %arg11: memref<8x64xf32, #tpu.memory_space<vmem>>, %arg12: memref<8x8xf32, #tpu.memory_space<vmem>>, %arg13: memref<8x8xf32, #tpu.memory_space<vmem>>) attributes {dimension_semantics = [#tpu.dimension_semantics<parallel>], iteration_bounds = array<i64: 1>, scalar_prefetch = 0 : i64, scratch_operands = 0 : i64, tpu.core_type = #tpu.core_type<tc>, window_params = [{transform_indices = @transform_0, window_bounds = array<i64: 8, 8>}, {transform_indices = @transform_1, window_bounds = array<i64: 8, 8>}, {pipeline_mode = #tpu.pipeline_mode<synchronous>, transform_indices = @transform_2, window_bounds = array<i64: 8, 32>}, {pipeline_mode = #tpu.pipeline_mode<synchronous>, transform_indices = @transform_3, window_bounds = array<i64: 1, 32>}, {pipeline_mode = #tpu.pipeline_mode<synchronous>, transform_indices = @transform_4, window_bounds = array<i64: 32, 16>}, {pipeline_mode = #tpu.pipeline_mode<synchronous>, transform_indices = @transform_5, window_bounds = array<i64: 1, 16>}, {pipeline_mode = #tpu.pipeline_mode<synchronous>, transform_indices = @transform_6, window_bounds = array<i64: 8, 256>}, {pipeline_mode = #tpu.pipeline_mode<synchronous>, transform_indices = @transform_7, window_bounds = array<i64: 1, 256>}, {pipeline_mode = #tpu.pipeline_mode<synchronous>, transform_indices = @transform_8, window_bounds = array<i64: 256, 64>}, {pipeline_mode = #tpu.pipeline_mode<synchronous>, transform_indices = @transform_9, window_bounds = array<i64: 1, 64>}, {transform_indices = @transform_10, window_bounds = array<i64: 8, 64>}, {transform_indices = @transform_11, window_bounds = array<i64: 8, 8>}, {transform_indices = @transform_12, window_bounds = array<i64: 8, 8>}]} {
    %c0 = arith.constant 0 : index
    %c0_0 = arith.constant 0 : index
    %0 = vector.load %arg1[%c0, %c0_0] : memref<8x8xf32, #tpu.memory_space<vmem>>, vector<8x8xf32>
    %c0_1 = arith.constant 0 : index
    %c0_2 = arith.constant 0 : index
    %1 = vector.load %arg3[%c0_1, %c0_2] : memref<8x32xf32, #tpu.memory_space<vmem>>, vector<8x32xf32>
    %cst = arith.constant dense<0.000000e+00> : vector<8x32xf32>
    %2 = tpu.matmul %0, %1, %cst {dimension_numbers = #tpu.dot_dimension_numbers<[1], [0], [0], [1], [0, 0, 1, 1], [], []>} : vector<8x8xf32>, vector<8x32xf32>, vector<8x32xf32> -> vector<8x32xf32>
    %c0_3 = arith.constant 0 : index
    %c0_4 = arith.constant 0 : index
    %3 = vector.load %arg4[%c0_3, %c0_4] : memref<1x32xf32, #tpu.memory_space<vmem>>, vector<1x32xf32>
    %4 = vector.broadcast %3 : vector<1x32xf32> to vector<8x32xf32>
    %5 = arith.addf %2, %4 : vector<8x32xf32>
    %cst_5 = arith.constant 0.000000e+00 : f32
    %6 = vector.broadcast %cst_5 : f32 to vector<8x32xf32>
    %7 = arith.cmpf oge, %5, %6 : vector<8x32xf32>
    %cst_6 = arith.constant 2.000000e-01 : f32
    %8 = vector.broadcast %cst_6 : f32 to vector<8x32xf32>
    %9 = arith.mulf %8, %5 : vector<8x32xf32>
    %10 = arith.select %7, %5, %9 : vector<8x32xi1>, vector<8x32xf32>
    %c0_7 = arith.constant 0 : index
    %c0_8 = arith.constant 0 : index
    %11 = vector.load %arg5[%c0_7, %c0_8] : memref<32x16xf32, #tpu.memory_space<vmem>>, vector<32x16xf32>
    %cst_9 = arith.constant dense<0.000000e+00> : vector<8x16xf32>
    %12 = tpu.matmul %10, %11, %cst_9 {dimension_numbers = #tpu.dot_dimension_numbers<[1], [0], [0], [1], [0, 0, 1, 1], [], []>} : vector<8x32xf32>, vector<32x16xf32>, vector<8x16xf32> -> vector<8x16xf32>
    %c0_10 = arith.constant 0 : index
    %c0_11 = arith.constant 0 : index
    %13 = vector.load %arg6[%c0_10, %c0_11] : memref<1x16xf32, #tpu.memory_space<vmem>>, vector<1x16xf32>
    %14 = vector.broadcast %13 : vector<1x16xf32> to vector<8x16xf32>
    %15 = arith.addf %12, %14 : vector<8x16xf32>
    %16 = vector.extract_strided_slice %15 {offsets = [0, 0], sizes = [8, 8], strides = [1, 1]} : vector<8x16xf32> to vector<8x8xf32>
    %17 = vector.extract_strided_slice %15 {offsets = [0, 8], sizes = [8, 8], strides = [1, 1]} : vector<8x16xf32> to vector<8x8xf32>
    %18 = math.exp %17 : vector<8x8xf32>
    %c0_12 = arith.constant 0 : index
    %c0_13 = arith.constant 0 : index
    %19 = vector.load %arg2[%c0_12, %c0_13] : memref<8x8xf32, #tpu.memory_space<vmem>>, vector<8x8xf32>
    %20 = arith.mulf %18, %19 : vector<8x8xf32>
    %21 = arith.addf %16, %20 : vector<8x8xf32>
    %22 = math.tanh %21 : vector<8x8xf32>
    %c0_14 = arith.constant 0 : index
    %c0_15 = arith.constant 0 : index
    %23 = vector.load %arg12[%c0_14, %c0_15] : memref<8x8xf32, #tpu.memory_space<vmem>>, vector<8x8xf32>
    tpu.vector_store %arg12[%c0_14, %c0_15], %16 {strides = array<i32>} : memref<8x8xf32, #tpu.memory_space<vmem>>, vector<8x8xf32>,
    %c0_16 = arith.constant 0 : index
    %c0_17 = arith.constant 0 : index
    %24 = vector.load %arg13[%c0_16, %c0_17] : memref<8x8xf32, #tpu.memory_space<vmem>>, vector<8x8xf32>
    tpu.vector_store %arg13[%c0_16, %c0_17], %18 {strides = array<i32>} : memref<8x8xf32, #tpu.memory_space<vmem>>, vector<8x8xf32>,
    %c0_18 = arith.constant 0 : index
    %c0_19 = arith.constant 0 : index
    %25 = vector.load %arg7[%c0_18, %c0_19] : memref<8x256xf32, #tpu.memory_space<vmem>>, vector<8x256xf32>
    %cst_20 = arith.constant dense<0.000000e+00> : vector<8x256xf32>
    %26 = tpu.matmul %22, %25, %cst_20 {dimension_numbers = #tpu.dot_dimension_numbers<[1], [0], [0], [1], [0, 0, 1, 1], [], []>} : vector<8x8xf32>, vector<8x256xf32>, vector<8x256xf32> -> vector<8x256xf32>
    %c0_21 = arith.constant 0 : index
    %c0_22 = arith.constant 0 : index
    %27 = vector.load %arg8[%c0_21, %c0_22] : memref<1x256xf32, #tpu.memory_space<vmem>>, vector<1x256xf32>
    %28 = vector.broadcast %27 : vector<1x256xf32> to vector<8x256xf32>
    %29 = arith.addf %26, %28 : vector<8x256xf32>
    %cst_23 = arith.constant 0.000000e+00 : f32
    %30 = vector.broadcast %cst_23 : f32 to vector<8x256xf32>
    %31 = arith.cmpf oge, %29, %30 : vector<8x256xf32>
    %cst_24 = arith.constant 2.000000e-01 : f32
    %32 = vector.broadcast %cst_24 : f32 to vector<8x256xf32>
    %33 = arith.mulf %32, %29 : vector<8x256xf32>
    %34 = arith.select %31, %29, %33 : vector<8x256xi1>, vector<8x256xf32>
    %c0_25 = arith.constant 0 : index
    %c0_26 = arith.constant 0 : index
    %35 = vector.load %arg9[%c0_25, %c0_26] : memref<256x64xf32, #tpu.memory_space<vmem>>, vector<256x64xf32>
    %cst_27 = arith.constant dense<0.000000e+00> : vector<8x64xf32>
    %36 = tpu.matmul %34, %35, %cst_27 {dimension_numbers = #tpu.dot_dimension_numbers<[1], [0], [0], [1], [0, 0, 1, 1], [], []>} : vector<8x256xf32>, vector<256x64xf32>, vector<8x64xf32> -> vector<8x64xf32>
    %c0_28 = arith.constant 0 : index
    %c0_29 = arith.constant 0 : index
    %37 = vector.load %arg10[%c0_28, %c0_29] : memref<1x64xf32, #tpu.memory_space<vmem>>, vector<1x64xf32>
    %38 = vector.broadcast %37 : vector<1x64xf32> to vector<8x64xf32>
    %39 = arith.addf %36, %38 : vector<8x64xf32>
    %40 = math.tanh %39 : vector<8x64xf32>
    %c0_30 = arith.constant 0 : index
    %c0_31 = arith.constant 0 : index
    %41 = vector.load %arg11[%c0_30, %c0_31] : memref<8x64xf32, #tpu.memory_space<vmem>>, vector<8x64xf32>
    tpu.vector_store %arg11[%c0_30, %c0_31], %40 {strides = array<i32>} : memref<8x64xf32, #tpu.memory_space<vmem>>, vector<8x64xf32>,
    return
  }
  func.func @transform_0(%arg0: i32) -> (i32, i32) {
    %c0_i32 = arith.constant 0 : i32
    %c0_i32_0 = arith.constant 0 : i32
    return %arg0, %c0_i32 : i32, i32
  }
  func.func @transform_1(%arg0: i32) -> (i32, i32) {
    %c0_i32 = arith.constant 0 : i32
    %c0_i32_0 = arith.constant 0 : i32
    return %arg0, %c0_i32 : i32, i32
  }
  func.func @transform_2(%arg0: i32) -> (i32, i32) {
    %c0_i32 = arith.constant 0 : i32
    %c0_i32_0 = arith.constant 0 : i32
    %c0_i32_1 = arith.constant 0 : i32
    return %c0_i32, %c0_i32_0 : i32, i32
  }
  func.func @transform_3(%arg0: i32) -> (i32, i32) {
    %c0_i32 = arith.constant 0 : i32
    %c0_i32_0 = arith.constant 0 : i32
    %c0_i32_1 = arith.constant 0 : i32
    return %c0_i32, %c0_i32_0 : i32, i32
  }
  func.func @transform_4(%arg0: i32) -> (i32, i32) {
    %c0_i32 = arith.constant 0 : i32
    %c0_i32_0 = arith.constant 0 : i32
    %c0_i32_1 = arith.constant 0 : i32
    return %c0_i32, %c0_i32_0 : i32, i32
  }
  func.func @transform_5(%arg0: i32) -> (i32, i32) {
    %c0_i32 = arith.constant 0 : i32
    %c0_i32_0 = arith.constant 0 : i32
    %c0_i32_1 = arith.constant 0 : i32
    return %c0_i32, %c0_i32_0 : i32, i32
  }
  func.func @transform_6(%arg0: i32) -> (i32, i32) {
    %c0_i32 = arith.constant 0 : i32
    %c0_i32_0 = arith.constant 0 : i32
    %c0_i32_1 = arith.constant 0 : i32
    return %c0_i32, %c0_i32_0 : i32, i32
  }
  func.func @transform_7(%arg0: i32) -> (i32, i32) {
    %c0_i32 = arith.constant 0 : i32
    %c0_i32_0 = arith.constant 0 : i32
    %c0_i32_1 = arith.constant 0 : i32
    return %c0_i32, %c0_i32_0 : i32, i32
  }
  func.func @transform_8(%arg0: i32) -> (i32, i32) {
    %c0_i32 = arith.constant 0 : i32
    %c0_i32_0 = arith.constant 0 : i32
    %c0_i32_1 = arith.constant 0 : i32
    return %c0_i32, %c0_i32_0 : i32, i32
  }
  func.func @transform_9(%arg0: i32) -> (i32, i32) {
    %c0_i32 = arith.constant 0 : i32
    %c0_i32_0 = arith.constant 0 : i32
    %c0_i32_1 = arith.constant 0 : i32
    return %c0_i32, %c0_i32_0 : i32, i32
  }
  func.func @transform_10(%arg0: i32) -> (i32, i32) {
    %c0_i32 = arith.constant 0 : i32
    %c0_i32_0 = arith.constant 0 : i32
    return %arg0, %c0_i32 : i32, i32
  }
  func.func @transform_11(%arg0: i32) -> (i32, i32) {
    %c0_i32 = arith.constant 0 : i32
    %c0_i32_0 = arith.constant 0 : i32
    return %arg0, %c0_i32 : i32, i32
  }
  func.func @transform_12(%arg0: i32) -> (i32, i32) {
    %c0_i32 = arith.constant 0 : i32
    %c0_i32_0 = arith.constant 0 : i32
    return %arg0, %c0_i32 : i32, i32
  }
}

</mosaic_0001>

<llo_original>
// kernel: tpu_custom_call.1
$region0: #{tpu_custom_call.1}
  #allocation0 [shape = 'u32[]', space=smem, size = 0x4, offset = 0x4, fixed_abs, tag = 'smem constant byte address 0x4 - core index']
  #allocation1 [shape = 'u32[144,128]{1,0:T(1,128)}', space=vmem, size = 0x12000, scoped, tag = 'internal scratch']
  %s0 = inlined_call_operand.vmem [shape: f32[8,8], index: 0, kind: input, shape index: {}]
  %s1 = inlined_call_operand.vmem [shape: f32[8,8], index: 1, kind: input, shape index: {}]
  %s2 = inlined_call_operand.vmem [shape: f32[8,32], index: 2, kind: input, shape index: {}]
  %s3 = inlined_call_operand.vmem [shape: f32[1,32], index: 3, kind: input, shape index: {}]
  %s4 = inlined_call_operand.vmem [shape: f32[32,16], index: 4, kind: input, shape index: {}]
  %s5 = inlined_call_operand.vmem [shape: f32[1,16], index: 5, kind: input, shape index: {}]
  %s6 = inlined_call_operand.vmem [shape: f32[8,256], index: 6, kind: input, shape index: {}]
  %s7 = inlined_call_operand.vmem [shape: f32[1,256], index: 7, kind: input, shape index: {}]
  %s8 = inlined_call_operand.vmem [shape: f32[256,64], index: 8, kind: input, shape index: {}]
  %s9 = inlined_call_operand.vmem [shape: f32[1,64], index: 9, kind: input, shape index: {}]
  %s10 = inlined_call_operand.hbm [shape: f32[8,64], index: 10, kind: output, shape index: {0}]
  %s11 = inlined_call_operand.hbm [shape: f32[8,8], index: 11, kind: output, shape index: {1}]
  %s12 = inlined_call_operand.hbm [shape: f32[8,8], index: 12, kind: output, shape index: {2}]
  %13 = xla_tuple %s10, %s11, %s12
  %s14 = sld [smem:[#allocation0]]
  $region66: #{tpu_custom_call.1} parent=0
    _
  %s16 = ssub.s32 1, %s14
  %s17 = scalar_select 0, %s16, %s14
  $region1: #{tpu_custom_call.1} parent=0
    #allocation2 [shape = 'u8[4096]{0}', space=vmem, size = 0x1000, scoped, tag = 'output window, operand 0, single buffered']
    #allocation3 [shape = 's32[1]{0}', space=sflag, size = 0x4, scoped, tag = 'scoped memory for tpu_custom_call.1']
    #allocation4 [shape = 'u8[4096]{0}', space=vmem, size = 0x1000, scoped, tag = 'output window, operand 1, single buffered']
    #allocation5 [shape = 's32[1]{0}', space=sflag, size = 0x4, scoped, tag = 'scoped memory for tpu_custom_call.1']
    #allocation6 [shape = 'u8[4096]{0}', space=vmem, size = 0x1000, scoped, tag = 'output window, operand 2, single buffered']
    %18 = vsyncpa [#allocation3], 0
    %19 = vsyncpa [#allocation5], 0
    // Predicated region
    $region2: #{tpu_custom_call.1} parent=1 // pred_check
      _
    $region3: #{tpu_custom_call.1} parent=1 // pred_check_branch
      %21 = sbr.rel (0) target = $region5
    $region4: #{tpu_custom_call.1} parent=1 // pred_region
      _
    $region5: #{tpu_custom_call.1} parent=1 // pred_fallthru
      _
    // Predicated region
    $region6: #{tpu_custom_call.1} parent=1 // pred_check
      _
    $region7: #{tpu_custom_call.1} parent=1 // pred_check_branch
      %23 = sbr.rel (0) target = $region9
    $region8: #{tpu_custom_call.1} parent=1 // pred_region
      _
    $region9: #{tpu_custom_call.1} parent=1 // pred_fallthru
      _
    // Predicated region
    $region10: #{tpu_custom_call.1} parent=1 // pred_check
      _
    $region11: #{tpu_custom_call.1} parent=1 // pred_check_branch
      %25 = sbr.rel (0) target = $region13
    $region12: #{tpu_custom_call.1} parent=1 // pred_region
      _
    $region13: #{tpu_custom_call.1} parent=1 // pred_fallthru
      _
    // Predicated region
    $region14: #{tpu_custom_call.1} parent=1 // pred_check
      _
    $region15: #{tpu_custom_call.1} parent=1 // pred_check_branch
      %27 = sbr.rel (0) target = $region17
    $region16: #{tpu_custom_call.1} parent=1 // pred_region
      _
    $region17: #{tpu_custom_call.1} parent=1 // pred_fallthru
      _
    // Predicated region
    $region18: #{tpu_custom_call.1} parent=1 // pred_check
      _
    $region19: #{tpu_custom_call.1} parent=1 // pred_check_branch
      %29 = sbr.rel (0) target = $region21
    $region20: #{tpu_custom_call.1} parent=1 // pred_region
      _
    $region21: #{tpu_custom_call.1} parent=1 // pred_fallthru
      _
    // Predicated region
    $region22: #{tpu_custom_call.1} parent=1 // pred_check
      _
    $region23: #{tpu_custom_call.1} parent=1 // pred_check_branch
      %31 = sbr.rel (0) target = $region25
    $region24: #{tpu_custom_call.1} parent=1 // pred_region
      _
    $region25: #{tpu_custom_call.1} parent=1 // pred_fallthru
      _
    // Predicated region
    $region26: #{tpu_custom_call.1} parent=1 // pred_check
      _
    $region27: #{tpu_custom_call.1} parent=1 // pred_check_branch
      %33 = sbr.rel (0) target = $region29
    $region28: #{tpu_custom_call.1} parent=1 // pred_region
      _
    $region29: #{tpu_custom_call.1} parent=1 // pred_fallthru
      _
    // Predicated region
    $region30: #{tpu_custom_call.1} parent=1 // pred_check
      _
    $region31: #{tpu_custom_call.1} parent=1 // pred_check_branch
      %35 = sbr.rel (0) target = $region33
    $region32: #{tpu_custom_call.1} parent=1 // pred_region
      _
    $region33: #{tpu_custom_call.1} parent=1 // pred_fallthru
      _
    // Predicated region
    $region34: #{tpu_custom_call.1} parent=1 // pred_check
      _
    $region35: #{tpu_custom_call.1} parent=1 // pred_check_branch
      %37 = sbr.rel (0) target = $region37
    $region36: #{tpu_custom_call.1} parent=1 // pred_region
      _
    $region37: #{tpu_custom_call.1} parent=1 // pred_fallthru
      _
    // Predicated region
    $region38: #{tpu_custom_call.1} parent=1 // pred_check
      _
    $region39: #{tpu_custom_call.1} parent=1 // pred_check_branch
      %39 = sbr.rel (0) target = $region41
    $region40: #{tpu_custom_call.1} parent=1 // pred_region
      _
    $region41: #{tpu_custom_call.1} parent=1 // pred_fallthru
      _
    %v40 = vld [vmem:[%s0] sm:$0xff]
    %v41 = vld [vmem:[%s2] sm:$0xff]
    %v42 = vld [vmem:[%s3] sm:$0x1]
    %v44 = vlaneseq
    %v45 = vshrl.u32 %v44, 7
    %v46 = vsub.s32 0, %v45
    %v47 = vrot.slane %v42, %v46
    %vm49 = vcmask 64512
    %v51 = vsel %vm49, %v40, 0
    %53 = vmatprep.subr.mxu0 0.0
    %54 = vmatpush1.msra.mxu0 %v41
    %55 = vmatprep.subr.mxu0 0.0
    %56 = vmatpush1.msra.mxu0 0.0
    %57 = vmatprep.subr.mxu0 0.0
    %58 = vmatpush1.msra.mxu0 0.0
    %59 = vmatprep.subr.mxu0 0.0
    %60 = vmatpush1.msra.mxu0 0.0
    %61 = vmatprep.subr.mxu0 0.0
    %62 = vmatpush1.msra.mxu0 0.0
    %63 = vmatprep.subr.mxu0 0.0
    %64 = vmatpush1.msra.mxu0 0.0
    %65 = vmatprep.subr.mxu0 0.0
    %66 = vmatpush1.msra.mxu0 0.0
    %67 = vmatprep.subr.mxu0 0.0
    %68 = vmatpush1.msra.mxu0 0.0
    %69 = vmatprep.subr.mxu0 0.0
    %70 = vmatpush1.msra.mxu0 0.0
    %71 = vmatprep.subr.mxu0 0.0
    %72 = vmatpush1.msra.mxu0 0.0
    %73 = vmatprep.subr.mxu0 0.0
    %74 = vmatpush1.msra.mxu0 0.0
    %75 = vmatprep.subr.mxu0 0.0
    %76 = vmatpush1.msra.mxu0 0.0
    %77 = vmatprep.subr.mxu0 0.0
    %78 = vmatpush1.msra.mxu0 0.0
    %79 = vmatprep.subr.mxu0 0.0
    %80 = vmatpush1.msra.mxu0 0.0
    %81 = vmatprep.subr.mxu0 0.0
    %82 = vmatpush1.msra.mxu0 0.0
    %83 = vmatprep.subr.mxu0 0.0
    %84 = vmatpush1.msra.mxu0 0.0
    %85 = vmatprep.subr.mxu0 0.0
    %86 = vmatpush1.msra.mxu0 0.0
    %87 = vmatprep.subr.mxu0 0.0
    %88 = vmatpush1.msra.mxu0 0.0
    %89 = vmatprep.subr.mxu0 0.0
    %90 = vmatpush1.msra.mxu0 0.0
    %91 = vmatprep.subr.mxu0 0.0
    %92 = vmatpush1.msra.mxu0 0.0
    %93 = vmatprep.subr.mxu0 0.0
    %94 = vmatpush1.msra.mxu0 0.0
    %95 = vmatprep.subr.mxu0 0.0
    %96 = vmatpush1.msra.mxu0 0.0
    %97 = vmatprep.subr.mxu0 0.0
    %98 = vmatpush1.msra.mxu0 0.0
    %99 = vmatprep.subr.mxu0 0.0
    %100 = vmatpush1.msra.mxu0 0.0
    %101 = vmatprep.subr.mxu0 0.0
    %102 = vmatpush1.msra.mxu0 0.0
    %103 = vmatprep.subr.mxu0 0.0
    %104 = vmatpush1.msra.mxu0 0.0
    %105 = vmatprep.subr.mxu0 0.0
    %106 = vmatpush1.msra.mxu0 0.0
    %107 = vmatprep.subr.mxu0 0.0
    %108 = vmatpush1.msra.mxu0 0.0
    %109 = vmatprep.subr.mxu0 0.0
    %110 = vmatpush1.msra.mxu0 0.0
    %111 = vmatprep.subr.mxu0 0.0
    %112 = vmatpush1.msra.mxu0 0.0
    %113 = vmatprep.subr.mxu0 0.0
    %114 = vmatpush1.msra.mxu0 0.0
    %115 = vmatprep.subr.mxu0 0.0
    %116 = vmatpush1.msra.mxu0 0.0
    %117 = vmatprep.mubr.f32.mxu0 0.0
    %118 = vmatmul.mubr.f32.gmra.mrb[0].mxu0 %v51
    %v119 = vpop.f32.mrb[0].mxu0
    %v120 = vadd.f32 %v47, %v119
    %v121 = vpop.f32.mrb[0].mxu0
    %122 = vdwg.mxu0
    %vm123 = vcmp.ge.f32.partialorder %v120, 0.0
    %v124 = vmul.f32 %v120, 0.2
    %v125 = vsel %vm123, %v120, %v124
    %v126 = vld [vmem:[%s4] sm:$0xff]
    %v127 = vld [vmem:[%s4 + $0x8] sm:$0xff]
    %v128 = vld [vmem:[%s4 + $0x10] sm:$0xff]
    %v129 = vld [vmem:[%s4 + $0x18] sm:$0xff]
    %v130 = vld [vmem:[%s5] sm:$0x1]
    %v132 = vlaneseq
    %v133 = vshrl.u32 %v132, 7
    %v134 = vsub.s32 0, %v133
    %v135 = vrot.slane %v130, %v134
    %vm137 = vcmask 261120
    %v139 = vsel %vm137, %v125, 0
    %141 = vmatprep.subr.mxu0 0.0
    %142 = vmatpush1.msra.mxu0 %v126
    %143 = vmatprep.subr.mxu0 0.0
    %144 = vmatpush1.msra.mxu0 %v127
    %145 = vmatprep.subr.mxu0 0.0
    %146 = vmatpush1.msra.mxu0 %v128
    %147 = vmatprep.subr.mxu0 0.0
    %148 = vmatpush1.msra.mxu0 %v129
    %149 = vmatprep.subr.mxu0 0.0
    %150 = vmatpush1.msra.mxu0 0.0
    %151 = vmatprep.subr.mxu0 0.0
    %152 = vmatpush1.msra.mxu0 0.0
    %153 = vmatprep.subr.mxu0 0.0
    %154 = vmatpush1.msra.mxu0 0.0
    %155 = vmatprep.subr.mxu0 0.0
    %156 = vmatpush1.msra.mxu0 0.0
    %157 = vmatprep.subr.mxu0 0.0
    %158 = vmatpush1.msra.mxu0 0.0
    %159 = vmatprep.subr.mxu0 0.0
    %160 = vmatpush1.msra.mxu0 0.0
    %161 = vmatprep.subr.mxu0 0.0
    %162 = vmatpush1.msra.mxu0 0.0
    %163 = vmatprep.subr.mxu0 0.0
    %164 = vmatpush1.msra.mxu0 0.0
    %165 = vmatprep.subr.mxu0 0.0
    %166 = vmatpush1.msra.mxu0 0.0
    %167 = vmatprep.subr.mxu0 0.0
    %168 = vmatpush1.msra.mxu0 0.0
    %169 = vmatprep.subr.mxu0 0.0
    %170 = vmatpush1.msra.mxu0 0.0
    %171 = vmatprep.subr.mxu0 0.0
    %172 = vmatpush1.msra.mxu0 0.0
    %173 = vmatprep.subr.mxu0 0.0
    %174 = vmatpush1.msra.mxu0 0.0
    %175 = vmatprep.subr.mxu0 0.0
    %176 = vmatpush1.msra.mxu0 0.0
    %177 = vmatprep.subr.mxu0 0.0
    %178 = vmatpush1.msra.mxu0 0.0
    %179 = vmatprep.subr.mxu0 0.0
    %180 = vmatpush1.msra.mxu0 0.0
    %181 = vmatprep.subr.mxu0 0.0
    %182 = vmatpush1.msra.mxu0 0.0
    %183 = vmatprep.subr.mxu0 0.0
    %184 = vmatpush1.msra.mxu0 0.0
    %185 = vmatprep.subr.mxu0 0.0
    %186 = vmatpush1.msra.mxu0 0.0
    %187 = vmatprep.subr.mxu0 0.0
    %188 = vmatpush1.msra.mxu0 0.0
    %189 = vmatprep.subr.mxu0 0.0
    %190 = vmatpush1.msra.mxu0 0.0
    %191 = vmatprep.subr.mxu0 0.0
    %192 = vmatpush1.msra.mxu0 0.0
    %193 = vmatprep.subr.mxu0 0.0
    %194 = vmatpush1.msra.mxu0 0.0
    %195 = vmatprep.subr.mxu0 0.0
    %196 = vmatpush1.msra.mxu0 0.0
    %197 = vmatprep.subr.mxu0 0.0
    %198 = vmatpush1.msra.mxu0 0.0
    %199 = vmatprep.subr.mxu0 0.0
    %200 = vmatpush1.msra.mxu0 0.0
    %201 = vmatprep.subr.mxu0 0.0
    %202 = vmatpush1.msra.mxu0 0.0
    %203 = vmatprep.subr.mxu0 0.0
    %204 = vmatpush1.msra.mxu0 0.0
    %205 = vmatprep.mubr.f32.mxu0 0.0
    %206 = vmatmul.mubr.f32.gmra.mrb[0].mxu0 %v139
    %v207 = vpop.f32.mrb[0].mxu0
    %v208 = vadd.f32 %v135, %v207
    %v209 = vpop.f32.mrb[0].mxu0
    %210 = vdwg.mxu0
    %v211 = vmul.f32 %v208, 1.442695
    %v212 = vpow.pop %v211
    %v213 = vld [vmem:[%s1] sm:$0xff]
    %215 = vrot.lane.b32.xlu0 %v213, 8
    %v216 = vpop.permute.xlu0 %215
    %v218 = vmul.f32 %v212, %v216
    %220 = vrot.lane.b32.xlu0 %v218, 120
    %v221 = vpop.permute.xlu0 %220
    %v223 = vadd.f32 %v208, %v221
    %v224 = vtanh.pop %v223
    %225 = vst.msk [vmem:[#allocation4] sm:$0xff] %vm49, %v208
    %227 = vrot.lane.b32.xlu0 %v212, 120
    %v228 = vpop.permute.xlu0 %227
    %230 = vst.msk [vmem:[#allocation6] sm:$0xff] %vm49, %v228
    %v231 = vld [vmem:[%s6] sm:$0xff]
    %v232 = vld [vmem:[%s6 + $0x8] sm:$0xff]
    %v233 = vld [vmem:[%s7] sm:$0x3]
    %v235 = vlaneseq
    %v236 = vshrl.u32 %v235, 7
    %v237 = vsub.s32 0, %v236
    %v238 = vrot.slane %v233, %v237
    %v239 = vlaneseq
    %v240 = vshrl.u32 %v239, 7
    %v241 = vsub.s32 1, %v240
    %v242 = vrot.slane %v233, %v241
    %v246 = vsel %vm49, %v224, 0
    %248 = vmatprep.subr.mxu0 %v232
    %249 = vmatpush1.msra.mxu0 %v231
    %250 = vmatprep.subr.mxu0 0.0
    %251 = vmatpush1.msra.mxu0 0.0
    %252 = vmatprep.subr.mxu0 0.0
    %253 = vmatpush1.msra.mxu0 0.0
    %254 = vmatprep.subr.mxu0 0.0
    %255 = vmatpush1.msra.mxu0 0.0
    %256 = vmatprep.subr.mxu0 0.0
    %257 = vmatpush1.msra.mxu0 0.0
    %258 = vmatprep.subr.mxu0 0.0
    %259 = vmatpush1.msra.mxu0 0.0
    %260 = vmatprep.subr.mxu0 0.0
    %261 = vmatpush1.msra.mxu0 0.0
    %262 = vmatprep.subr.mxu0 0.0
    %263 = vmatpush1.msra.mxu0 0.0
    %264 = vmatprep.subr.mxu0 0.0
    %265 = vmatpush1.msra.mxu0 0.0
    %266 = vmatprep.subr.mxu0 0.0
    %267 = vmatpush1.msra.mxu0 0.0
    %268 = vmatprep.subr.mxu0 0.0
    %269 = vmatpush1.msra.mxu0 0.0
    %270 = vmatprep.subr.mxu0 0.0
    %271 = vmatpush1.msra.mxu0 0.0
    %272 = vmatprep.subr.mxu0 0.0
    %273 = vmatpush1.msra.mxu0 0.0
    %274 = vmatprep.subr.mxu0 0.0
    %275 = vmatpush1.msra.mxu0 0.0
    %276 = vmatprep.subr.mxu0 0.0
    %277 = vmatpush1.msra.mxu0 0.0
    %278 = vmatprep.subr.mxu0 0.0
    %279 = vmatpush1.msra.mxu0 0.0
    %280 = vmatprep.subr.mxu0 0.0
    %281 = vmatpush1.msra.mxu0 0.0
    %282 = vmatprep.subr.mxu0 0.0
    %283 = vmatpush1.msra.mxu0 0.0
    %284 = vmatprep.subr.mxu0 0.0
    %285 = vmatpush1.msra.mxu0 0.0
    %286 = vmatprep.subr.mxu0 0.0
    %287 = vmatpush1.msra.mxu0 0.0
    %288 = vmatprep.subr.mxu0 0.0
    %289 = vmatpush1.msra.mxu0 0.0
    %290 = vmatprep.subr.mxu0 0.0
    %291 = vmatpush1.msra.mxu0 0.0
    %292 = vmatprep.subr.mxu0 0.0
    %293 = vmatpush1.msra.mxu0 0.0
    %294 = vmatprep.subr.mxu0 0.0
    %295 = vmatpush1.msra.mxu0 0.0
    %296 = vmatprep.subr.mxu0 0.0
    %297 = vmatpush1.msra.mxu0 0.0
    %298 = vmatprep.subr.mxu0 0.0
    %299 = vmatpush1.msra.mxu0 0.0
    %300 = vmatprep.subr.mxu0 0.0
    %301 = vmatpush1.msra.mxu0 0.0
    %302 = vmatprep.subr.mxu0 0.0
    %303 = vmatpush1.msra.mxu0 0.0
    %304 = vmatprep.subr.mxu0 0.0
    %305 = vmatpush1.msra.mxu0 0.0
    %306 = vmatprep.subr.mxu0 0.0
    %307 = vmatpush1.msra.mxu0 0.0
    %308 = vmatprep.subr.mxu0 0.0
    %309 = vmatpush1.msra.mxu0 0.0
    %310 = vmatprep.subr.mxu0 0.0
    %311 = vmatpush1.msra.mxu0 0.0
    %312 = vmatprep.mubr.f32.mxu0 0.0
    %313 = vmatmul.mubr.f32.gmra.mrb[0].mxu0 %v246
    %v314 = vpop.f32.mrb[0].mxu0
    %v315 = vadd.f32 %v238, %v314
    %v316 = vpop.f32.mrb[0].mxu0
    %v317 = vadd.f32 %v242, %v316
    %318 = vdwg.mxu0
    %vm319 = vcmp.ge.f32.partialorder %v315, 0.0
    %vm320 = vcmp.ge.f32.partialorder %v317, 0.0
    %v321 = vmul.f32 %v315, 0.2
    %v322 = vmul.f32 %v317, 0.2
    %v323 = vsel %vm319, %v315, %v321
    %v324 = vsel %vm320, %v317, %v322
    %v325 = vld [vmem:[%s8] sm:$0xff]
    %v326 = vld [vmem:[%s8 + $0x8] sm:$0xff]
    %v327 = vld [vmem:[%s8 + $0x10] sm:$0xff]
    %v328 = vld [vmem:[%s8 + $0x18] sm:$0xff]
    %v329 = vld [vmem:[%s8 + $0x20] sm:$0xff]
    %v330 = vld [vmem:[%s8 + $0x28] sm:$0xff]
    %v331 = vld [vmem:[%s8 + $0x30] sm:$0xff]
    %v332 = vld [vmem:[%s8 + $0x38] sm:$0xff]
    %v333 = vld [vmem:[%s8 + $0x40] sm:$0xff]
    %v334 = vld [vmem:[%s8 + $0x48] sm:$0xff]
    %v335 = vld [vmem:[%s8 + $0x50] sm:$0xff]
    %v336 = vld [vmem:[%s8 + $0x58] sm:$0xff]
    %v337 = vld [vmem:[%s8 + $0x60] sm:$0xff]
    %v338 = vld [vmem:[%s8 + $0x68] sm:$0xff]
    %v339 = vld [vmem:[%s8 + $0x70] sm:$0xff]
    %v340 = vld [vmem:[%s8 + $0x78] sm:$0xff]
    %v341 = vld [vmem:[%s8 + $0x80] sm:$0xff]
    %v342 = vld [vmem:[%s8 + $0x88] sm:$0xff]
    %v343 = vld [vmem:[%s8 + $0x90] sm:$0xff]
    %v344 = vld [vmem:[%s8 + $0x98] sm:$0xff]
    %v345 = vld [vmem:[%s8 + $0xa0] sm:$0xff]
    %v346 = vld [vmem:[%s8 + $0xa8] sm:$0xff]
    %v347 = vld [vmem:[%s8 + $0xb0] sm:$0xff]
    %v348 = vld [vmem:[%s8 + $0xb8] sm:$0xff]
    %v349 = vld [vmem:[%s8 + $0xc0] sm:$0xff]
    %v350 = vld [vmem:[%s8 + $0xc8] sm:$0xff]
    %v351 = vld [vmem:[%s8 + $0xd0] sm:$0xff]
    %v352 = vld [vmem:[%s8 + $0xd8] sm:$0xff]
    %v353 = vld [vmem:[%s8 + $0xe0] sm:$0xff]
    %v354 = vld [vmem:[%s8 + $0xe8] sm:$0xff]
    %v355 = vld [vmem:[%s8 + $0xf0] sm:$0xff]
    %v356 = vld [vmem:[%s8 + $0xf8] sm:$0xff]
    %v357 = vld [vmem:[%s9] sm:$0x1]
    %v359 = vlaneseq
    %v360 = vshrl.u32 %v359, 7
    %v361 = vsub.s32 0, %v360
    %v362 = vrot.slane %v357, %v361
    %364 = vmatprep.subr.mxu0 0.0
    %365 = vmatpush1.msra.mxu0 %v325
    %366 = vmatprep.subr.mxu0 0.0
    %367 = vmatpush1.msra.mxu0 %v326
    %368 = vmatprep.subr.mxu0 0.0
    %369 = vmatpush1.msra.mxu0 %v327
    %370 = vmatprep.subr.mxu0 0.0
    %371 = vmatpush1.msra.mxu0 %v328
    %372 = vmatprep.subr.mxu0 0.0
    %373 = vmatpush1.msra.mxu0 %v329
    %374 = vmatprep.subr.mxu0 0.0
    %375 = vmatpush1.msra.mxu0 %v330
    %376 = vmatprep.subr.mxu0 0.0
    %377 = vmatpush1.msra.mxu0 %v331
    %378 = vmatprep.subr.mxu0 0.0
    %379 = vmatpush1.msra.mxu0 %v332
    %380 = vmatprep.subr.mxu0 0.0
    %381 = vmatpush1.msra.mxu0 %v333
    %382 = vmatprep.subr.mxu0 0.0
    %383 = vmatpush1.msra.mxu0 %v334
    %384 = vmatprep.subr.mxu0 0.0
    %385 = vmatpush1.msra.mxu0 %v335
    %386 = vmatprep.subr.mxu0 0.0
    %387 = vmatpush1.msra.mxu0 %v336
    %388 = vmatprep.subr.mxu0 0.0
    %389 = vmatpush1.msra.mxu0 %v337
    %390 = vmatprep.subr.mxu0 0.0
    %391 = vmatpush1.msra.mxu0 %v338
    %392 = vmatprep.subr.mxu0 0.0
    %393 = vmatpush1.msra.mxu0 %v339
    %394 = vmatprep.subr.mxu0 0.0
    %395 = vmatpush1.msra.mxu0 %v340
    %396 = vmatprep.subr.mxu0 0.0
    %397 = vmatpush1.msra.mxu0 %v341
    %398 = vmatprep.subr.mxu0 0.0
    %399 = vmatpush1.msra.mxu0 %v342
    %400 = vmatprep.subr.mxu0 0.0
    %401 = vmatpush1.msra.mxu0 %v343
    %402 = vmatprep.subr.mxu0 0.0
    %403 = vmatpush1.msra.mxu0 %v344
    %404 = vmatprep.subr.mxu0 0.0
    %405 = vmatpush1.msra.mxu0 %v345
    %406 = vmatprep.subr.mxu0 0.0
    %407 = vmatpush1.msra.mxu0 %v346
    %408 = vmatprep.subr.mxu0 0.0
    %409 = vmatpush1.msra.mxu0 %v347
    %410 = vmatprep.subr.mxu0 0.0
    %411 = vmatpush1.msra.mxu0 %v348
    %412 = vmatprep.subr.mxu0 0.0
    %413 = vmatpush1.msra.mxu0 %v349
    %414 = vmatprep.subr.mxu0 0.0
    %415 = vmatpush1.msra.mxu0 %v350
    %416 = vmatprep.subr.mxu0 0.0
    %417 = vmatpush1.msra.mxu0 %v351
    %418 = vmatprep.subr.mxu0 0.0
    %419 = vmatpush1.msra.mxu0 %v352
    %420 = vmatprep.subr.mxu0 0.0
    %421 = vmatpush1.msra.mxu0 %v353
    %422 = vmatprep.subr.mxu0 0.0
    %423 = vmatpush1.msra.mxu0 %v354
    %424 = vmatprep.subr.mxu0 0.0
    %425 = vmatpush1.msra.mxu0 %v355
    %426 = vmatprep.subr.mxu0 0.0
    %427 = vmatpush1.msra.mxu0 %v356
    %428 = vmatprep.mubr.f32.mxu0 %v324
    %429 = vmatmul.mubr.f32.gmra.mrb[0].mxu0 %v323
    %v430 = vpop.f32.mrb[0].mxu0
    %v431 = vadd.f32 %v362, %v430
    %v432 = vpop.f32.mrb[0].mxu0
    %433 = vdwg.mxu0
    %v434 = vtanh.pop %v431
    %vm435 = vcmask 523264
    %436 = vst.msk [vmem:[#allocation2] sm:$0xff] %vm435, %v434
    // Predicated region
    $region42: #{tpu_custom_call.1} parent=1 // pred_check
      _
    $region43: #{tpu_custom_call.1} parent=1 // pred_check_branch
      %438 = sbr.rel (0) target = $region45
    $region44: #{tpu_custom_call.1} parent=1 // pred_region
      %s440 = ssub.s32 128, 128
      %441 = vsyncadd [#allocation3], %s440
      %s443 = sshll.u32 [#allocation2], 4
      %s444 = int_to_ptr.vmem [resolvable:$true] %s443
      %446 = dma.vmem_to_hbm [thread:$0]  %s444, 128, %s10, [#allocation3]
    $region45: #{tpu_custom_call.1} parent=1 // pred_fallthru
      _
    // Predicated region
    $region46: #{tpu_custom_call.1} parent=1 // pred_check
      _
    $region47: #{tpu_custom_call.1} parent=1 // pred_check_branch
      %448 = sbr.rel (0) target = $region49
    $region48: #{tpu_custom_call.1} parent=1 // pred_region
      %s450 = ssub.s32 128, 128
      %451 = vsyncadd [#allocation5], %s450
      %s453 = sshll.u32 [#allocation4], 4
      %s454 = int_to_ptr.vmem [resolvable:$true] %s453
      %456 = dma.vmem_to_hbm [thread:$0]  %s454, 128, %s11, [#allocation5]
    $region49: #{tpu_custom_call.1} parent=1 // pred_fallthru
      _
    // Predicated region
    $region50: #{tpu_custom_call.1} parent=1 // pred_check
      _
    $region51: #{tpu_custom_call.1} parent=1 // pred_check_branch
      %458 = sbr.rel (0) target = $region53
    $region52: #{tpu_custom_call.1} parent=1 // pred_region
      %s460 = ssub.s32 128, 128
      %461 = vsyncadd [#allocation5], %s460
      %s463 = sshll.u32 [#allocation6], 4
      %s464 = int_to_ptr.vmem [resolvable:$true] %s463
      %466 = dma.vmem_to_hbm [thread:$0]  %s464, 128, %s12, [#allocation5]
    $region53: #{tpu_custom_call.1} parent=1 // pred_fallthru
      _
    // Predicated region
    $region54: #{tpu_custom_call.1} parent=1 // pred_check
      _
    $region55: #{tpu_custom_call.1} parent=1 // pred_check_branch
      %468 = sbr.rel (0) target = $region57
    $region56: #{tpu_custom_call.1} parent=1 // pred_region
      %469 = dma.done [#allocation3], 128
    $region57: #{tpu_custom_call.1} parent=1 // pred_fallthru
      _
    // Predicated region
    $region58: #{tpu_custom_call.1} parent=1 // pred_check
      _
    $region59: #{tpu_custom_call.1} parent=1 // pred_check_branch
      %471 = sbr.rel (0) target = $region61
    $region60: #{tpu_custom_call.1} parent=1 // pred_region
      %472 = dma.done [#allocation5], 128
    $region61: #{tpu_custom_call.1} parent=1 // pred_fallthru
      _
    // Predicated region
    $region62: #{tpu_custom_call.1} parent=1 // pred_check
      _
    $region63: #{tpu_custom_call.1} parent=1 // pred_check_branch
      %474 = sbr.rel (0) target = $region65
    $region64: #{tpu_custom_call.1} parent=1 // pred_region
      %475 = dma.done [#allocation5], 128
    $region65: #{tpu_custom_call.1} parent=1 // pred_fallthru
      _
    %476 = vsyncpa [#allocation3], 1
    %477 = vsyncpa [#allocation5], 1

</llo_original>
